<compile_context>
chip_gen: v5e
topology: v5e:2x2
jax: 0.10.0
libtpu: 0.0.40
codegen_flags: <defaults>
</compile_context>

<pallas_src>
import functools
import numpy as np
import jax
import jax.numpy as jnp
from jax import lax
from jax.experimental import pallas as pl
from jax.experimental.pallas import tpu as pltpu

_UNROLL = 8  # inner unroll factor; also the sublane-aligned store granularity


# ----------------------------------------------------------------------------
# Deterministic parameter construction (mirrors hierESN.__init__, numpy seed 1)
# ----------------------------------------------------------------------------
def create_sparse_matrix(n_reservoir, sparsity, rng):
    rows, cols = n_reservoir, n_reservoir
    W = rng.uniform(-1.0, 1.0, (rows, cols))
    num_zeros = int(np.ceil(sparsity * rows))
    for i_col in range(cols):
        row_indices = rng.permutation(rows)
        zero_indices = row_indices[:num_zeros]
        W[zero_indices, i_col] = 0.0
    return W


def make_hier_esn_params(n_input, n_output, n_res1, n_res2,
                         gamma1=0.01, gamma2=0.01, rho1=1.0, rho2=1.0,
                         sparsity1=0.9, sparsity2=0.9, phi=1.0, seed=1):
    rng = np.random.RandomState(seed)
    win1 = gamma1 * rng.randn(n_input, n_res1)
    W1 = create_sparse_matrix(n_res1, sparsity1, rng)
    W1 = rho1 * W1 / np.max(np.absolute(np.linalg.eigvals(W1)))
    win2 = gamma2 * rng.randn(n_res1, n_res2)
    W2 = create_sparse_matrix(n_res2, sparsity2, rng)
    W2 = rho2 * W2 / np.max(np.absolute(np.linalg.eigvals(W2)))
    n_res = n_res1 + n_res2
    wout = rng.uniform(-phi, phi, [n_output, n_res]) / n_res
    f32 = lambda a: jnp.asarray(a, dtype=jnp.float32)
    return dict(Win1=f32(win1), W1=f32(W1), Win2=f32(win2), W2=f32(W2),
                Wout=f32(wout))


# ----------------------------------------------------------------------------
# Pallas kernel: recurrent scan over one T-chunk (state carried across chunks)
# ----------------------------------------------------------------------------
def _hier_esn_kernel(x_ref, win1_ref, w1_ref, win2_ref, w2_ref, wout_t_ref,
                     out_ref, xp_ref, v1_ref, v2_ref, *rest,
                     alpha1, alpha2, use_readout, chunk_t, unroll):
    feat_ref = rest[0] if use_readout else None

    # First grid step: zero the carried hidden states (hierESN.reset()).
    @pl.when(pl.program_id(0) == 0)
    def _():
        v1_ref[...] = jnp.zeros_like(v1_ref)
        v2_ref[...] = jnp.zeros_like(v2_ref)

    # Hoisted, non-recurrent input projection: one well-shaped matmul per
    # chunk instead of `chunk_t` M=1 matmuls inside the serial scan.
    xp_ref[...] = jnp.dot(x_ref[...], win1_ref[...],
                          preferred_element_type=jnp.float32)

    w1 = w1_ref[...]
    w2 = w2_ref[...]
    win2 = win2_ref[...]
    dest = feat_ref if use_readout else out_ref

    def block_step(b, carry):
        v1, v2 = carry
        base = pl.multiple_of(b * unroll, unroll)
        xp_blk = xp_ref[pl.ds(base, unroll), :]        # one aligned load / block
        rows = []
        for j in range(unroll):                        # manual unroll (tiny vregs)
            pre1 = (jnp.dot(v1, w1, preferred_element_type=jnp.float32)
                    + xp_blk[j:j + 1, :])
            v1 = (1.0 - alpha1) * v1 + alpha1 * jnp.tanh(pre1)
            pre2 = (jnp.dot(v2, w2, preferred_element_type=jnp.float32)
                    + jnp.dot(v1, win2, preferred_element_type=jnp.float32))
            v2 = (1.0 - alpha2) * v2 + alpha2 * jnp.tanh(pre2)
            rows.append(jnp.concatenate([v1, v2], axis=1))
        # One sublane-aligned (unroll, nRes) store per `unroll` steps.
        dest[pl.ds(base, unroll), :] = jnp.concatenate(rows, axis=0)
        return (v1, v2)

    # Hidden state stays in the loop carry (registers); VMEM scratch is only
    # read/written once per chunk to carry state across grid iterations.
    v1_fin, v2_fin = lax.fori_loop(0, chunk_t // unroll, block_step,
                                   (v1_ref[...], v2_ref[...]))
    v1_ref[...] = v1_fin
    v2_ref[...] = v2_fin

    if use_readout:
        # Hoisted readout: one (chunk_t, nRes) x (nRes, nOut) matmul per chunk.
        out_ref[...] = jnp.dot(feat_ref[...], wout_t_ref[...],
                               preferred_element_type=jnp.float32)


def hier_esn_forward(x, params, *, alpha1=0.5, alpha2=0.5, use_readout=False,
                     max_chunk=512):
    """x: [T, nInput] float32.  Returns [T, nR1+nR2] (or [T, nOutput])."""
    assert max_chunk % _UNROLL == 0
    x = jnp.asarray(x, jnp.float32)
    T, n_input = x.shape
    n_res1 = params["W1"].shape[0]
    n_res2 = params["W2"].shape[0]
    n_res = n_res1 + n_res2
    n_out = params["Wout"].shape[0]
    out_dim = n_out if use_readout else n_res

    # Pad T to a multiple of the chunk size (pad steps have zero input and are
    # appended at the end, so they never influence the real outputs).
    t_pad = -(-T // _UNROLL) * _UNROLL
    if t_pad <= max_chunk:
        chunk_t = t_pad
    else:
        chunk_t = max_chunk
        t_pad = -(-T // chunk_t) * chunk_t
    n_chunks = t_pad // chunk_t
    if t_pad != T:
        x = jnp.pad(x, ((0, t_pad - T), (0, 0)))

    kernel = functools.partial(
        _hier_esn_kernel,
        alpha1=float(alpha1), alpha2=float(alpha2),
        use_readout=use_readout, chunk_t=chunk_t, unroll=_UNROLL)

    scratch = [
        pltpu.VMEM((chunk_t, n_res1), jnp.float32),   # hoisted x @ Win1
        pltpu.VMEM((1, n_res1), jnp.float32),         # carried v1 state
        pltpu.VMEM((1, n_res2), jnp.float32),         # carried v2 state
    ]
    if use_readout:
        scratch.append(pltpu.VMEM((chunk_t, n_res), jnp.float32))  # hidden feats

    full = lambda shp: pl.BlockSpec(shp, lambda i: (0, 0))
    out = pl.pallas_call(
        kernel,
        out_shape=jax.ShapeDtypeStruct((t_pad, out_dim), jnp.float32),
        grid=(n_chunks,),
        in_specs=[
            pl.BlockSpec((chunk_t, n_input), lambda i: (i, 0)),   # x chunk
            full(params["Win1"].shape),
            full(params["W1"].shape),
            full(params["Win2"].shape),
            full(params["W2"].shape),
            full((n_res, n_out)),                                 # Wout^T
        ],
        out_specs=pl.BlockSpec((chunk_t, out_dim), lambda i: (i, 0)),
        scratch_shapes=scratch,
        compiler_params=pltpu.CompilerParams(
            dimension_semantics=("arbitrary",)),                  # serial scan
    )(x, params["Win1"], params["W1"], params["Win2"], params["W2"],
      params["Wout"].T)
    return out[:T]


# ----------------------------------------------------------------------------
# Pure-JAX reference (mirrors the torch forward exactly)
# ----------------------------------------------------------------------------
def hier_esn_reference(x, params, *, alpha1=0.5, alpha2=0.5, use_readout=False):
    n_res1 = params["W1"].shape[0]
    n_res2 = params["W2"].shape[0]

    def step(carry, u):
        v1p, v2p = carry
        v1 = (1 - alpha1) * v1p + alpha1 * jnp.tanh(
            v1p @ params["W1"] + u @ params["Win1"])
        v2 = (1 - alpha2) * v2p + alpha2 * jnp.tanh(
            v2p @ params["W2"] + v1 @ params["Win2"])
        out = jnp.concatenate([v1, v2], axis=-1)
        if use_readout:
            out = out @ params["Wout"].T
        return (v1, v2), out

    init = (jnp.zeros((n_res1,), jnp.float32), jnp.zeros((n_res2,), jnp.float32))
    _, outs = lax.scan(step, init, x)
    return outs


if __name__ == "__main__":
    n_input, n_output = 16, 4
    n_res1, n_res2 = 32, 32
    params = make_hier_esn_params(n_input, n_output, n_res1, n_res2, seed=1)

    key0, key1 = jax.random.split(jax.random.PRNGKey(0))

    # Case 1: T=8, single chunk, no readout (module defaults).
    T = 8
    x = jax.random.normal(key0, (T, n_input), dtype=jnp.float32)
    out = jax.block_until_ready(hier_esn_forward(x, params, use_readout=False))
    ref = jax.block_until_ready(hier_esn_reference(x, params, use_readout=False))
    assert out.shape == (T, n_res1 + n_res2), out.shape
    np.testing.assert_allclose(np.asarray(out), np.asarray(ref),
                               rtol=1e-4, atol=1e-5)

    # Case 2: multi-chunk grid (T=20, chunk=8) — state carried across grid
    # iterations, trailing zero-padding discarded.
    T2 = 20
    x2 = jax.random.normal(key1, (T2, n_input), dtype=jnp.float32)
    out2 = jax.block_until_ready(
        hier_esn_forward(x2, params, use_readout=False, max_chunk=8))
    ref2 = jax.block_until_ready(hier_esn_reference(x2, params, use_readout=False))
    assert out2.shape == (T2, n_res1 + n_res2), out2.shape
    np.testing.assert_allclose(np.asarray(out2), np.asarray(ref2),
                               rtol=1e-4, atol=1e-5)

    # Case 3: useReadout=True path (hoisted readout matmul).
    out3 = jax.block_until_ready(hier_esn_forward(x, params, use_readout=True))
    ref3 = jax.block_until_ready(hier_esn_reference(x, params, use_readout=True))
    assert out3.shape == (T, n_output), out3.shape
    np.testing.assert_allclose(np.asarray(out3), np.asarray(ref3),
                               rtol=1e-4, atol=1e-5)

    print("KERNEL_OK")
</pallas_src>

<mosaic_0001>
module attributes {stable_mosaic.version = 11 : i64} {
  func.func @_hier_esn_kernel(%arg0: i32, %arg1: memref<8x16xf32, #tpu.memory_space<vmem>>, %arg2: memref<16x32xf32, #tpu.memory_space<vmem>>, %arg3: memref<32x32xf32, #tpu.memory_space<vmem>>, %arg4: memref<32x32xf32, #tpu.memory_space<vmem>>, %arg5: memref<32x32xf32, #tpu.memory_space<vmem>>, %arg6: memref<64x4xf32, #tpu.memory_space<vmem>>, %arg7: memref<8x64xf32, #tpu.memory_space<vmem>>, %arg8: memref<8x32xf32, #tpu.memory_space<vmem>>, %arg9: memref<1x32xf32, #tpu.memory_space<vmem>>, %arg10: memref<1x32xf32, #tpu.memory_space<vmem>>) attributes {dimension_semantics = [#tpu.dimension_semantics<arbitrary>], iteration_bounds = array<i64: 1>, scalar_prefetch = 0 : i64, scratch_operands = 3 : i64, tpu.core_type = #tpu.core_type<tc>, window_params = [{transform_indices = @transform_0, window_bounds = array<i64: 8, 16>}, {pipeline_mode = #tpu.pipeline_mode<synchronous>, transform_indices = @transform_1, window_bounds = array<i64: 16, 32>}, {pipeline_mode = #tpu.pipeline_mode<synchronous>, transform_indices = @transform_2, window_bounds = array<i64: 32, 32>}, {pipeline_mode = #tpu.pipeline_mode<synchronous>, transform_indices = @transform_3, window_bounds = array<i64: 32, 32>}, {pipeline_mode = #tpu.pipeline_mode<synchronous>, transform_indices = @transform_4, window_bounds = array<i64: 32, 32>}, {pipeline_mode = #tpu.pipeline_mode<synchronous>, transform_indices = @transform_5, window_bounds = array<i64: 64, 4>}, {transform_indices = @transform_6, window_bounds = array<i64: 8, 64>}]} {
    %c0_i32 = arith.constant 0 : i32
    %0 = arith.cmpi eq, %arg0, %c0_i32 : i32
    %1 = arith.extui %0 : i1 to i32
    %c0_i32_0 = arith.constant 0 : i32
    %2 = arith.cmpi ne, %1, %c0_i32_0 : i32
    scf.if %2 {
      %cst_79 = arith.constant 0.000000e+00 : f32
      %173 = vector.broadcast %cst_79 : f32 to vector<1x32xf32>
      %c0_80 = arith.constant 0 : index
      %c0_81 = arith.constant 0 : index
      %174 = vector.load %arg9[%c0_80, %c0_81] : memref<1x32xf32, #tpu.memory_space<vmem>>, vector<1x32xf32>
      tpu.vector_store %arg9[%c0_80, %c0_81], %173 {strides = array<i32>} : memref<1x32xf32, #tpu.memory_space<vmem>>, vector<1x32xf32>,
      %cst_82 = arith.constant 0.000000e+00 : f32
      %175 = vector.broadcast %cst_82 : f32 to vector<1x32xf32>
      %c0_83 = arith.constant 0 : index
      %c0_84 = arith.constant 0 : index
      %176 = vector.load %arg10[%c0_83, %c0_84] : memref<1x32xf32, #tpu.memory_space<vmem>>, vector<1x32xf32>
      tpu.vector_store %arg10[%c0_83, %c0_84], %175 {strides = array<i32>} : memref<1x32xf32, #tpu.memory_space<vmem>>, vector<1x32xf32>,
    } else {
    }
    %c0 = arith.constant 0 : index
    %c0_1 = arith.constant 0 : index
    %3 = vector.load %arg1[%c0, %c0_1] : memref<8x16xf32, #tpu.memory_space<vmem>>, vector<8x16xf32>
    %c0_2 = arith.constant 0 : index
    %c0_3 = arith.constant 0 : index
    %4 = vector.load %arg2[%c0_2, %c0_3] : memref<16x32xf32, #tpu.memory_space<vmem>>, vector<16x32xf32>
    %cst = arith.constant dense<0.000000e+00> : vector<8x32xf32>
    %5 = tpu.matmul %3, %4, %cst {dimension_numbers = #tpu.dot_dimension_numbers<[1], [0], [0], [1], [0, 0, 1, 1], [], []>} : vector<8x16xf32>, vector<16x32xf32>, vector<8x32xf32> -> vector<8x32xf32>
    %c0_4 = arith.constant 0 : index
    %c0_5 = arith.constant 0 : index
    %6 = vector.load %arg8[%c0_4, %c0_5] : memref<8x32xf32, #tpu.memory_space<vmem>>, vector<8x32xf32>
    tpu.vector_store %arg8[%c0_4, %c0_5], %5 {strides = array<i32>} : memref<8x32xf32, #tpu.memory_space<vmem>>, vector<8x32xf32>,
    %c0_6 = arith.constant 0 : index
    %c0_7 = arith.constant 0 : index
    %7 = vector.load %arg3[%c0_6, %c0_7] : memref<32x32xf32, #tpu.memory_space<vmem>>, vector<32x32xf32>
    %c0_8 = arith.constant 0 : index
    %c0_9 = arith.constant 0 : index
    %8 = vector.load %arg5[%c0_8, %c0_9] : memref<32x32xf32, #tpu.memory_space<vmem>>, vector<32x32xf32>
    %c0_10 = arith.constant 0 : index
    %c0_11 = arith.constant 0 : index
    %9 = vector.load %arg4[%c0_10, %c0_11] : memref<32x32xf32, #tpu.memory_space<vmem>>, vector<32x32xf32>
    %c0_12 = arith.constant 0 : index
    %c0_13 = arith.constant 0 : index
    %10 = vector.load %arg9[%c0_12, %c0_13] : memref<1x32xf32, #tpu.memory_space<vmem>>, vector<1x32xf32>
    %c0_14 = arith.constant 0 : index
    %c0_15 = arith.constant 0 : index
    %11 = vector.load %arg10[%c0_14, %c0_15] : memref<1x32xf32, #tpu.memory_space<vmem>>, vector<1x32xf32>
    %c0_i32_16 = arith.constant 0 : i32
    %c8_i32 = arith.constant 8 : i32
    %12 = arith.muli %c0_i32_16, %c8_i32 : i32
    %13 = tpu.assume_multiple %12, 8 : i32
    %14 = arith.index_cast %13 : i32 to index
    %c0_17 = arith.constant 0 : index
    %15 = vector.load %arg8[%14, %c0_17] : memref<8x32xf32, #tpu.memory_space<vmem>>, vector<8x32xf32>
    %cst_18 = arith.constant dense<0.000000e+00> : vector<1x32xf32>
    %16 = tpu.matmul %10, %7, %cst_18 {dimension_numbers = #tpu.dot_dimension_numbers<[1], [0], [0], [1], [0, 0, 1, 1], [], []>} : vector<1x32xf32>, vector<32x32xf32>, vector<1x32xf32> -> vector<1x32xf32>
    %17 = vector.extract_strided_slice %15 {offsets = [0, 0], sizes = [1, 32], strides = [1, 1]} : vector<8x32xf32> to vector<1x32xf32>
    %18 = arith.addf %16, %17 : vector<1x32xf32>
    %cst_19 = arith.constant 5.000000e-01 : f32
    %19 = vector.broadcast %cst_19 : f32 to vector<1x32xf32>
    %20 = arith.mulf %19, %10 : vector<1x32xf32>
    %21 = math.tanh %18 : vector<1x32xf32>
    %cst_20 = arith.constant 5.000000e-01 : f32
    %22 = vector.broadcast %cst_20 : f32 to vector<1x32xf32>
    %23 = arith.mulf %22, %21 : vector<1x32xf32>
    %24 = arith.addf %20, %23 : vector<1x32xf32>
    %cst_21 = arith.constant dense<0.000000e+00> : vector<1x32xf32>
    %25 = tpu.matmul %11, %8, %cst_21 {dimension_numbers = #tpu.dot_dimension_numbers<[1], [0], [0], [1], [0, 0, 1, 1], [], []>} : vector<1x32xf32>, vector<32x32xf32>, vector<1x32xf32> -> vector<1x32xf32>
    %cst_22 = arith.constant dense<0.000000e+00> : vector<1x32xf32>
    %26 = tpu.matmul %24, %9, %cst_22 {dimension_numbers = #tpu.dot_dimension_numbers<[1], [0], [0], [1], [0, 0, 1, 1], [], []>} : vector<1x32xf32>, vector<32x32xf32>, vector<1x32xf32> -> vector<1x32xf32>
    %27 = arith.addf %25, %26 : vector<1x32xf32>
    %cst_23 = arith.constant 5.000000e-01 : f32
    %28 = vector.broadcast %cst_23 : f32 to vector<1x32xf32>
    %29 = arith.mulf %28, %11 : vector<1x32xf32>
    %30 = math.tanh %27 : vector<1x32xf32>
    %cst_24 = arith.constant 5.000000e-01 : f32
    %31 = vector.broadcast %cst_24 : f32 to vector<1x32xf32>
    %32 = arith.mulf %31, %30 : vector<1x32xf32>
    %33 = arith.addf %29, %32 : vector<1x32xf32>
    %34 = tpu.concatenate %24, %33 in 1 : vector<1x32xf32>, vector<1x32xf32> -> vector<1x64xf32>
    %cst_25 = arith.constant dense<0.000000e+00> : vector<1x32xf32>
    %35 = tpu.matmul %24, %7, %cst_25 {dimension_numbers = #tpu.dot_dimension_numbers<[1], [0], [0], [1], [0, 0, 1, 1], [], []>} : vector<1x32xf32>, vector<32x32xf32>, vector<1x32xf32> -> vector<1x32xf32>
    %36 = vector.extract_strided_slice %15 {offsets = [1, 0], sizes = [1, 32], strides = [1, 1]} : vector<8x32xf32> to vector<1x32xf32>
    %37 = arith.addf %35, %36 : vector<1x32xf32>
    %cst_26 = arith.constant 5.000000e-01 : f32
    %38 = vector.broadcast %cst_26 : f32 to vector<1x32xf32>
    %39 = arith.mulf %38, %24 : vector<1x32xf32>
    %40 = math.tanh %37 : vector<1x32xf32>
    %cst_27 = arith.constant 5.000000e-01 : f32
    %41 = vector.broadcast %cst_27 : f32 to vector<1x32xf32>
    %42 = arith.mulf %41, %40 : vector<1x32xf32>
    %43 = arith.addf %39, %42 : vector<1x32xf32>
    %cst_28 = arith.constant dense<0.000000e+00> : vector<1x32xf32>
    %44 = tpu.matmul %33, %8, %cst_28 {dimension_numbers = #tpu.dot_dimension_numbers<[1], [0], [0], [1], [0, 0, 1, 1], [], []>} : vector<1x32xf32>, vector<32x32xf32>, vector<1x32xf32> -> vector<1x32xf32>
    %cst_29 = arith.constant dense<0.000000e+00> : vector<1x32xf32>
    %45 = tpu.matmul %43, %9, %cst_29 {dimension_numbers = #tpu.dot_dimension_numbers<[1], [0], [0], [1], [0, 0, 1, 1], [], []>} : vector<1x32xf32>, vector<32x32xf32>, vector<1x32xf32> -> vector<1x32xf32>
    %46 = arith.addf %44, %45 : vector<1x32xf32>
    %cst_30 = arith.constant 5.000000e-01 : f32
    %47 = vector.broadcast %cst_30 : f32 to vector<1x32xf32>
    %48 = arith.mulf %47, %33 : vector<1x32xf32>
    %49 = math.tanh %46 : vector<1x32xf32>
    %cst_31 = arith.constant 5.000000e-01 : f32
    %50 = vector.broadcast %cst_31 : f32 to vector<1x32xf32>
    %51 = arith.mulf %50, %49 : vector<1x32xf32>
    %52 = arith.addf %48, %51 : vector<1x32xf32>
    %53 = tpu.concatenate %43, %52 in 1 : vector<1x32xf32>, vector<1x32xf32> -> vector<1x64xf32>
    %cst_32 = arith.constant dense<0.000000e+00> : vector<1x32xf32>
    %54 = tpu.matmul %43, %7, %cst_32 {dimension_numbers = #tpu.dot_dimension_numbers<[1], [0], [0], [1], [0, 0, 1, 1], [], []>} : vector<1x32xf32>, vector<32x32xf32>, vector<1x32xf32> -> vector<1x32xf32>
    %55 = vector.extract_strided_slice %15 {offsets = [2, 0], sizes = [1, 32], strides = [1, 1]} : vector<8x32xf32> to vector<1x32xf32>
    %56 = arith.addf %54, %55 : vector<1x32xf32>
    %cst_33 = arith.constant 5.000000e-01 : f32
    %57 = vector.broadcast %cst_33 : f32 to vector<1x32xf32>
    %58 = arith.mulf %57, %43 : vector<1x32xf32>
    %59 = math.tanh %56 : vector<1x32xf32>
    %cst_34 = arith.constant 5.000000e-01 : f32
    %60 = vector.broadcast %cst_34 : f32 to vector<1x32xf32>
    %61 = arith.mulf %60, %59 : vector<1x32xf32>
    %62 = arith.addf %58, %61 : vector<1x32xf32>
    %cst_35 = arith.constant dense<0.000000e+00> : vector<1x32xf32>
    %63 = tpu.matmul %52, %8, %cst_35 {dimension_numbers = #tpu.dot_dimension_numbers<[1], [0], [0], [1], [0, 0, 1, 1], [], []>} : vector<1x32xf32>, vector<32x32xf32>, vector<1x32xf32> -> vector<1x32xf32>
    %cst_36 = arith.constant dense<0.000000e+00> : vector<1x32xf32>
    %64 = tpu.matmul %62, %9, %cst_36 {dimension_numbers = #tpu.dot_dimension_numbers<[1], [0], [0], [1], [0, 0, 1, 1], [], []>} : vector<1x32xf32>, vector<32x32xf32>, vector<1x32xf32> -> vector<1x32xf32>
    %65 = arith.addf %63, %64 : vector<1x32xf32>
    %cst_37 = arith.constant 5.000000e-01 : f32
    %66 = vector.broadcast %cst_37 : f32 to vector<1x32xf32>
    %67 = arith.mulf %66, %52 : vector<1x32xf32>
    %68 = math.tanh %65 : vector<1x32xf32>
    %cst_38 = arith.constant 5.000000e-01 : f32
    %69 = vector.broadcast %cst_38 : f32 to vector<1x32xf32>
    %70 = arith.mulf %69, %68 : vector<1x32xf32>
    %71 = arith.addf %67, %70 : vector<1x32xf32>
    %72 = tpu.concatenate %62, %71 in 1 : vector<1x32xf32>, vector<1x32xf32> -> vector<1x64xf32>
    %cst_39 = arith.constant dense<0.000000e+00> : vector<1x32xf32>
    %73 = tpu.matmul %62, %7, %cst_39 {dimension_numbers = #tpu.dot_dimension_numbers<[1], [0], [0], [1], [0, 0, 1, 1], [], []>} : vector<1x32xf32>, vector<32x32xf32>, vector<1x32xf32> -> vector<1x32xf32>
    %74 = vector.extract_strided_slice %15 {offsets = [3, 0], sizes = [1, 32], strides = [1, 1]} : vector<8x32xf32> to vector<1x32xf32>
    %75 = arith.addf %73, %74 : vector<1x32xf32>
    %cst_40 = arith.constant 5.000000e-01 : f32
    %76 = vector.broadcast %cst_40 : f32 to vector<1x32xf32>
    %77 = arith.mulf %76, %62 : vector<1x32xf32>
    %78 = math.tanh %75 : vector<1x32xf32>
    %cst_41 = arith.constant 5.000000e-01 : f32
    %79 = vector.broadcast %cst_41 : f32 to vector<1x32xf32>
    %80 = arith.mulf %79, %78 : vector<1x32xf32>
    %81 = arith.addf %77, %80 : vector<1x32xf32>
    %cst_42 = arith.constant dense<0.000000e+00> : vector<1x32xf32>
    %82 = tpu.matmul %71, %8, %cst_42 {dimension_numbers = #tpu.dot_dimension_numbers<[1], [0], [0], [1], [0, 0, 1, 1], [], []>} : vector<1x32xf32>, vector<32x32xf32>, vector<1x32xf32> -> vector<1x32xf32>
    %cst_43 = arith.constant dense<0.000000e+00> : vector<1x32xf32>
    %83 = tpu.matmul %81, %9, %cst_43 {dimension_numbers = #tpu.dot_dimension_numbers<[1], [0], [0], [1], [0, 0, 1, 1], [], []>} : vector<1x32xf32>, vector<32x32xf32>, vector<1x32xf32> -> vector<1x32xf32>
    %84 = arith.addf %82, %83 : vector<1x32xf32>
    %cst_44 = arith.constant 5.000000e-01 : f32
    %85 = vector.broadcast %cst_44 : f32 to vector<1x32xf32>
    %86 = arith.mulf %85, %71 : vector<1x32xf32>
    %87 = math.tanh %84 : vector<1x32xf32>
    %cst_45 = arith.constant 5.000000e-01 : f32
    %88 = vector.broadcast %cst_45 : f32 to vector<1x32xf32>
    %89 = arith.mulf %88, %87 : vector<1x32xf32>
    %90 = arith.addf %86, %89 : vector<1x32xf32>
    %91 = tpu.concatenate %81, %90 in 1 : vector<1x32xf32>, vector<1x32xf32> -> vector<1x64xf32>
    %cst_46 = arith.constant dense<0.000000e+00> : vector<1x32xf32>
    %92 = tpu.matmul %81, %7, %cst_46 {dimension_numbers = #tpu.dot_dimension_numbers<[1], [0], [0], [1], [0, 0, 1, 1], [], []>} : vector<1x32xf32>, vector<32x32xf32>, vector<1x32xf32> -> vector<1x32xf32>
    %93 = vector.extract_strided_slice %15 {offsets = [4, 0], sizes = [1, 32], strides = [1, 1]} : vector<8x32xf32> to vector<1x32xf32>
    %94 = arith.addf %92, %93 : vector<1x32xf32>
    %cst_47 = arith.constant 5.000000e-01 : f32
    %95 = vector.broadcast %cst_47 : f32 to vector<1x32xf32>
    %96 = arith.mulf %95, %81 : vector<1x32xf32>
    %97 = math.tanh %94 : vector<1x32xf32>
    %cst_48 = arith.constant 5.000000e-01 : f32
    %98 = vector.broadcast %cst_48 : f32 to vector<1x32xf32>
    %99 = arith.mulf %98, %97 : vector<1x32xf32>
    %100 = arith.addf %96, %99 : vector<1x32xf32>
    %cst_49 = arith.constant dense<0.000000e+00> : vector<1x32xf32>
    %101 = tpu.matmul %90, %8, %cst_49 {dimension_numbers = #tpu.dot_dimension_numbers<[1], [0], [0], [1], [0, 0, 1, 1], [], []>} : vector<1x32xf32>, vector<32x32xf32>, vector<1x32xf32> -> vector<1x32xf32>
    %cst_50 = arith.constant dense<0.000000e+00> : vector<1x32xf32>
    %102 = tpu.matmul %100, %9, %cst_50 {dimension_numbers = #tpu.dot_dimension_numbers<[1], [0], [0], [1], [0, 0, 1, 1], [], []>} : vector<1x32xf32>, vector<32x32xf32>, vector<1x32xf32> -> vector<1x32xf32>
    %103 = arith.addf %101, %102 : vector<1x32xf32>
    %cst_51 = arith.constant 5.000000e-01 : f32
    %104 = vector.broadcast %cst_51 : f32 to vector<1x32xf32>
    %105 = arith.mulf %104, %90 : vector<1x32xf32>
    %106 = math.tanh %103 : vector<1x32xf32>
    %cst_52 = arith.constant 5.000000e-01 : f32
    %107 = vector.broadcast %cst_52 : f32 to vector<1x32xf32>
    %108 = arith.mulf %107, %106 : vector<1x32xf32>
    %109 = arith.addf %105, %108 : vector<1x32xf32>
    %110 = tpu.concatenate %100, %109 in 1 : vector<1x32xf32>, vector<1x32xf32> -> vector<1x64xf32>
    %cst_53 = arith.constant dense<0.000000e+00> : vector<1x32xf32>
    %111 = tpu.matmul %100, %7, %cst_53 {dimension_numbers = #tpu.dot_dimension_numbers<[1], [0], [0], [1], [0, 0, 1, 1], [], []>} : vector<1x32xf32>, vector<32x32xf32>, vector<1x32xf32> -> vector<1x32xf32>
    %112 = vector.extract_strided_slice %15 {offsets = [5, 0], sizes = [1, 32], strides = [1, 1]} : vector<8x32xf32> to vector<1x32xf32>
    %113 = arith.addf %111, %112 : vector<1x32xf32>
    %cst_54 = arith.constant 5.000000e-01 : f32
    %114 = vector.broadcast %cst_54 : f32 to vector<1x32xf32>
    %115 = arith.mulf %114, %100 : vector<1x32xf32>
    %116 = math.tanh %113 : vector<1x32xf32>
    %cst_55 = arith.constant 5.000000e-01 : f32
    %117 = vector.broadcast %cst_55 : f32 to vector<1x32xf32>
    %118 = arith.mulf %117, %116 : vector<1x32xf32>
    %119 = arith.addf %115, %118 : vector<1x32xf32>
    %cst_56 = arith.constant dense<0.000000e+00> : vector<1x32xf32>
    %120 = tpu.matmul %109, %8, %cst_56 {dimension_numbers = #tpu.dot_dimension_numbers<[1], [0], [0], [1], [0, 0, 1, 1], [], []>} : vector<1x32xf32>, vector<32x32xf32>, vector<1x32xf32> -> vector<1x32xf32>
    %cst_57 = arith.constant dense<0.000000e+00> : vector<1x32xf32>
    %121 = tpu.matmul %119, %9, %cst_57 {dimension_numbers = #tpu.dot_dimension_numbers<[1], [0], [0], [1], [0, 0, 1, 1], [], []>} : vector<1x32xf32>, vector<32x32xf32>, vector<1x32xf32> -> vector<1x32xf32>
    %122 = arith.addf %120, %121 : vector<1x32xf32>
    %cst_58 = arith.constant 5.000000e-01 : f32
    %123 = vector.broadcast %cst_58 : f32 to vector<1x32xf32>
    %124 = arith.mulf %123, %109 : vector<1x32xf32>
    %125 = math.tanh %122 : vector<1x32xf32>
    %cst_59 = arith.constant 5.000000e-01 : f32
    %126 = vector.broadcast %cst_59 : f32 to vector<1x32xf32>
    %127 = arith.mulf %126, %125 : vector<1x32xf32>
    %128 = arith.addf %124, %127 : vector<1x32xf32>
    %129 = tpu.concatenate %119, %128 in 1 : vector<1x32xf32>, vector<1x32xf32> -> vector<1x64xf32>
    %cst_60 = arith.constant dense<0.000000e+00> : vector<1x32xf32>
    %130 = tpu.matmul %119, %7, %cst_60 {dimension_numbers = #tpu.dot_dimension_numbers<[1], [0], [0], [1], [0, 0, 1, 1], [], []>} : vector<1x32xf32>, vector<32x32xf32>, vector<1x32xf32> -> vector<1x32xf32>
    %131 = vector.extract_strided_slice %15 {offsets = [6, 0], sizes = [1, 32], strides = [1, 1]} : vector<8x32xf32> to vector<1x32xf32>
    %132 = arith.addf %130, %131 : vector<1x32xf32>
    %cst_61 = arith.constant 5.000000e-01 : f32
    %133 = vector.broadcast %cst_61 : f32 to vector<1x32xf32>
    %134 = arith.mulf %133, %119 : vector<1x32xf32>
    %135 = math.tanh %132 : vector<1x32xf32>
    %cst_62 = arith.constant 5.000000e-01 : f32
    %136 = vector.broadcast %cst_62 : f32 to vector<1x32xf32>
    %137 = arith.mulf %136, %135 : vector<1x32xf32>
    %138 = arith.addf %134, %137 : vector<1x32xf32>
    %cst_63 = arith.constant dense<0.000000e+00> : vector<1x32xf32>
    %139 = tpu.matmul %128, %8, %cst_63 {dimension_numbers = #tpu.dot_dimension_numbers<[1], [0], [0], [1], [0, 0, 1, 1], [], []>} : vector<1x32xf32>, vector<32x32xf32>, vector<1x32xf32> -> vector<1x32xf32>
    %cst_64 = arith.constant dense<0.000000e+00> : vector<1x32xf32>
    %140 = tpu.matmul %138, %9, %cst_64 {dimension_numbers = #tpu.dot_dimension_numbers<[1], [0], [0], [1], [0, 0, 1, 1], [], []>} : vector<1x32xf32>, vector<32x32xf32>, vector<1x32xf32> -> vector<1x32xf32>
    %141 = arith.addf %139, %140 : vector<1x32xf32>
    %cst_65 = arith.constant 5.000000e-01 : f32
    %142 = vector.broadcast %cst_65 : f32 to vector<1x32xf32>
    %143 = arith.mulf %142, %128 : vector<1x32xf32>
    %144 = math.tanh %141 : vector<1x32xf32>
    %cst_66 = arith.constant 5.000000e-01 : f32
    %145 = vector.broadcast %cst_66 : f32 to vector<1x32xf32>
    %146 = arith.mulf %145, %144 : vector<1x32xf32>
    %147 = arith.addf %143, %146 : vector<1x32xf32>
    %148 = tpu.concatenate %138, %147 in 1 : vector<1x32xf32>, vector<1x32xf32> -> vector<1x64xf32>
    %cst_67 = arith.constant dense<0.000000e+00> : vector<1x32xf32>
    %149 = tpu.matmul %138, %7, %cst_67 {dimension_numbers = #tpu.dot_dimension_numbers<[1], [0], [0], [1], [0, 0, 1, 1], [], []>} : vector<1x32xf32>, vector<32x32xf32>, vector<1x32xf32> -> vector<1x32xf32>
    %150 = vector.extract_strided_slice %15 {offsets = [7, 0], sizes = [1, 32], strides = [1, 1]} : vector<8x32xf32> to vector<1x32xf32>
    %151 = arith.addf %149, %150 : vector<1x32xf32>
    %cst_68 = arith.constant 5.000000e-01 : f32
    %152 = vector.broadcast %cst_68 : f32 to vector<1x32xf32>
    %153 = arith.mulf %152, %138 : vector<1x32xf32>
    %154 = math.tanh %151 : vector<1x32xf32>
    %cst_69 = arith.constant 5.000000e-01 : f32
    %155 = vector.broadcast %cst_69 : f32 to vector<1x32xf32>
    %156 = arith.mulf %155, %154 : vector<1x32xf32>
    %157 = arith.addf %153, %156 : vector<1x32xf32>
    %cst_70 = arith.constant dense<0.000000e+00> : vector<1x32xf32>
    %158 = tpu.matmul %147, %8, %cst_70 {dimension_numbers = #tpu.dot_dimension_numbers<[1], [0], [0], [1], [0, 0, 1, 1], [], []>} : vector<1x32xf32>, vector<32x32xf32>, vector<1x32xf32> -> vector<1x32xf32>
    %cst_71 = arith.constant dense<0.000000e+00> : vector<1x32xf32>
    %159 = tpu.matmul %157, %9, %cst_71 {dimension_numbers = #tpu.dot_dimension_numbers<[1], [0], [0], [1], [0, 0, 1, 1], [], []>} : vector<1x32xf32>, vector<32x32xf32>, vector<1x32xf32> -> vector<1x32xf32>
    %160 = arith.addf %158, %159 : vector<1x32xf32>
    %cst_72 = arith.constant 5.000000e-01 : f32
    %161 = vector.broadcast %cst_72 : f32 to vector<1x32xf32>
    %162 = arith.mulf %161, %147 : vector<1x32xf32>
    %163 = math.tanh %160 : vector<1x32xf32>
    %cst_73 = arith.constant 5.000000e-01 : f32
    %164 = vector.broadcast %cst_73 : f32 to vector<1x32xf32>
    %165 = arith.mulf %164, %163 : vector<1x32xf32>
    %166 = arith.addf %162, %165 : vector<1x32xf32>
    %167 = tpu.concatenate %157, %166 in 1 : vector<1x32xf32>, vector<1x32xf32> -> vector<1x64xf32>
    %168 = tpu.concatenate %34, %53, %72, %91, %110, %129, %148, %167 in 0 : vector<1x64xf32>, vector<1x64xf32>, vector<1x64xf32>, vector<1x64xf32>, vector<1x64xf32>, vector<1x64xf32>, vector<1x64xf32>, vector<1x64xf32> -> vector<8x64xf32>
    %169 = arith.index_cast %13 : i32 to index
    %c0_74 = arith.constant 0 : index
    %170 = vector.load %arg7[%169, %c0_74] : memref<8x64xf32, #tpu.memory_space<vmem>>, vector<8x64xf32>
    tpu.vector_store %arg7[%169, %c0_74], %168 {strides = array<i32>} : memref<8x64xf32, #tpu.memory_space<vmem>>, vector<8x64xf32>,
    %c1_i32 = arith.constant 1 : i32
    %c0_75 = arith.constant 0 : index
    %c0_76 = arith.constant 0 : index
    %171 = vector.load %arg9[%c0_75, %c0_76] : memref<1x32xf32, #tpu.memory_space<vmem>>, vector<1x32xf32>
    tpu.vector_store %arg9[%c0_75, %c0_76], %157 {strides = array<i32>} : memref<1x32xf32, #tpu.memory_space<vmem>>, vector<1x32xf32>,
    %c0_77 = arith.constant 0 : index
    %c0_78 = arith.constant 0 : index
    %172 = vector.load %arg10[%c0_77, %c0_78] : memref<1x32xf32, #tpu.memory_space<vmem>>, vector<1x32xf32>
    tpu.vector_store %arg10[%c0_77, %c0_78], %166 {strides = array<i32>} : memref<1x32xf32, #tpu.memory_space<vmem>>, vector<1x32xf32>,
    return
  }
  func.func @transform_0(%arg0: i32) -> (i32, i32) {
    %c0_i32 = arith.constant 0 : i32
    %c0_i32_0 = arith.constant 0 : i32
    return %arg0, %c0_i32 : i32, i32
  }
  func.func @transform_1(%arg0: i32) -> (i32, i32) {
    %c0_i32 = arith.constant 0 : i32
    %c0_i32_0 = arith.constant 0 : i32
    %c0_i32_1 = arith.constant 0 : i32
    return %c0_i32, %c0_i32_0 : i32, i32
  }
  func.func @transform_2(%arg0: i32) -> (i32, i32) {
    %c0_i32 = arith.constant 0 : i32
    %c0_i32_0 = arith.constant 0 : i32
    %c0_i32_1 = arith.constant 0 : i32
    return %c0_i32, %c0_i32_0 : i32, i32
  }
  func.func @transform_3(%arg0: i32) -> (i32, i32) {
    %c0_i32 = arith.constant 0 : i32
    %c0_i32_0 = arith.constant 0 : i32
    %c0_i32_1 = arith.constant 0 : i32
    return %c0_i32, %c0_i32_0 : i32, i32
  }
  func.func @transform_4(%arg0: i32) -> (i32, i32) {
    %c0_i32 = arith.constant 0 : i32
    %c0_i32_0 = arith.constant 0 : i32
    %c0_i32_1 = arith.constant 0 : i32
    return %c0_i32, %c0_i32_0 : i32, i32
  }
  func.func @transform_5(%arg0: i32) -> (i32, i32) {
    %c0_i32 = arith.constant 0 : i32
    %c0_i32_0 = arith.constant 0 : i32
    %c0_i32_1 = arith.constant 0 : i32
    return %c0_i32, %c0_i32_0 : i32, i32
  }
  func.func @transform_6(%arg0: i32) -> (i32, i32) {
    %c0_i32 = arith.constant 0 : i32
    %c0_i32_0 = arith.constant 0 : i32
    return %arg0, %c0_i32 : i32, i32
  }
}

</mosaic_0001>

<llo_original>
// kernel: tpu_custom_call.1
$region0: #{tpu_custom_call.1}
  #allocation0 [shape = 'u32[]', space=smem, size = 0x4, offset = 0x4, fixed_abs, tag = 'smem constant byte address 0x4 - core index']
  #allocation1 [shape = 'u32[72,128]{1,0:T(1,128)}', space=vmem, size = 0x9000, scoped, tag = 'internal scratch']
  #allocation2 [shape = 'f32[8,32]{1,0:T(8,128)}', space=vmem, size = 0x1000, scoped, tag = 'scratch operand']
  #allocation3 [shape = 'f32[1,32]{1,0:T(1,128)}', space=vmem, size = 0x200, scoped, tag = 'scratch operand']
  #allocation4 [shape = 'f32[1,32]{1,0:T(1,128)}', space=vmem, size = 0x200, scoped, tag = 'scratch operand']
  %s0 = inlined_call_operand.hbm [shape: f32[8,16], index: 0, kind: input, shape index: {}]
  %s1 = inlined_call_operand.hbm [shape: f32[16,32], index: 1, kind: input, shape index: {}]
  %s2 = inlined_call_operand.vmem [shape: f32[32,32], index: 2, kind: input, shape index: {}]
  %s3 = inlined_call_operand.vmem [shape: f32[32,32], index: 3, kind: input, shape index: {}]
  %s4 = inlined_call_operand.hbm [shape: f32[32,32], index: 4, kind: input, shape index: {}]
  %s5 = inlined_call_operand.vmem [shape: f32[64,4], index: 5, kind: input, shape index: {}]
  %s6 = inlined_call_operand.hbm [shape: f32[8,64], index: 6, kind: output, shape index: {}]
  %s7 = sld [smem:[#allocation0]]
  $region50: #{tpu_custom_call.1} parent=0
    _
  %s9 = ssub.s32 1, %s7
  %s10 = scalar_select 0, %s9, %s7
  $region1: #{tpu_custom_call.1} parent=0
    #allocation5 [shape = 'u8[4096]{0}', space=vmem, size = 0x1000, scoped, tag = 'input window, operand 0, single buffered']
    #allocation6 [shape = 's32[1]{0}', space=sflag, size = 0x4, scoped, tag = 'scoped memory for tpu_custom_call.1']
    #allocation7 [shape = 's32[1]{0}', space=sflag, size = 0x4, scoped, tag = 'scoped memory for tpu_custom_call.1']
    #allocation8 [shape = 'u8[8192]{0}', space=vmem, size = 0x2000, scoped, tag = 'input window, operand 1, single buffered']
    #allocation9 [shape = 's32[1]{0}', space=sflag, size = 0x4, scoped, tag = 'scoped memory for tpu_custom_call.1']
    #allocation10 [shape = 'u8[16384]{0}', space=vmem, size = 0x4000, scoped, tag = 'input window, operand 4, single buffered']
    #allocation11 [shape = 'u8[4096]{0}', space=vmem, size = 0x1000, scoped, tag = 'output window, operand 0, single buffered']
    %11 = vsyncpa [#allocation6], 0
    %12 = vsyncpa [#allocation9], 0
    %13 = vsyncpa [#allocation7], 0
    // Predicated region
    $region2: #{tpu_custom_call.1} parent=1 // pred_check
      _
    $region3: #{tpu_custom_call.1} parent=1 // pred_check_branch
      %15 = sbr.rel (0) target = $region5
    $region4: #{tpu_custom_call.1} parent=1 // pred_region
      %17 = vsyncadd [#allocation6], 0
      %s19 = sshll.u32 %s0, 4
      %s20 = int_to_ptr.hbm [resolvable:$true] %s19
      %s21 = sshll.u32 [#allocation5], 4
      %s22 = int_to_ptr.vmem [resolvable:$true] %s21
      %24 = dma.hbm_to_vmem [thread:$0]  %s20, 128, %s22, [#allocation6]
    $region5: #{tpu_custom_call.1} parent=1 // pred_fallthru
      _
    // Predicated region
    $region6: #{tpu_custom_call.1} parent=1 // pred_check
      _
    $region7: #{tpu_custom_call.1} parent=1 // pred_check_branch
      %26 = sbr.rel (0) target = $region9
    $region8: #{tpu_custom_call.1} parent=1 // pred_region
      %28 = vsyncadd [#allocation9], 0
      %s29 = sshll.u32 %s1, 4
      %s30 = int_to_ptr.hbm [resolvable:$true] %s29
      %s31 = sshll.u32 [#allocation8], 4
      %s32 = int_to_ptr.vmem [resolvable:$true] %s31
      %37 = dma.hbm_to_vmem [thread:$0]  %s30, 256, %s32, [#allocation9], 128, 128, 8
    $region9: #{tpu_custom_call.1} parent=1 // pred_fallthru
      _
    // Predicated region
    $region10: #{tpu_custom_call.1} parent=1 // pred_check
      _
    $region11: #{tpu_custom_call.1} parent=1 // pred_check_branch
      %39 = sbr.rel (0) target = $region13
    $region12: #{tpu_custom_call.1} parent=1 // pred_region
      _
    $region13: #{tpu_custom_call.1} parent=1 // pred_fallthru
      _
    // Predicated region
    $region14: #{tpu_custom_call.1} parent=1 // pred_check
      _
    $region15: #{tpu_custom_call.1} parent=1 // pred_check_branch
      %41 = sbr.rel (0) target = $region17
    $region16: #{tpu_custom_call.1} parent=1 // pred_region
      _
    $region17: #{tpu_custom_call.1} parent=1 // pred_fallthru
      _
    // Predicated region
    $region18: #{tpu_custom_call.1} parent=1 // pred_check
      _
    $region19: #{tpu_custom_call.1} parent=1 // pred_check_branch
      %43 = sbr.rel (0) target = $region21
    $region20: #{tpu_custom_call.1} parent=1 // pred_region
      %45 = vsyncadd [#allocation9], 0
      %s46 = sshll.u32 %s4, 4
      %s47 = int_to_ptr.hbm [resolvable:$true] %s46
      %s48 = sshll.u32 [#allocation10], 4
      %s49 = int_to_ptr.vmem [resolvable:$true] %s48
      %54 = dma.hbm_to_vmem [thread:$0]  %s47, 512, %s49, [#allocation9], 128, 128, 8
    $region21: #{tpu_custom_call.1} parent=1 // pred_fallthru
      _
    // Predicated region
    $region22: #{tpu_custom_call.1} parent=1 // pred_check
      _
    $region23: #{tpu_custom_call.1} parent=1 // pred_check_branch
      %56 = sbr.rel (0) target = $region25
    $region24: #{tpu_custom_call.1} parent=1 // pred_region
      _
    $region25: #{tpu_custom_call.1} parent=1 // pred_fallthru
      _
    // Predicated region
    $region26: #{tpu_custom_call.1} parent=1 // pred_check
      _
    $region27: #{tpu_custom_call.1} parent=1 // pred_check_branch
      %58 = sbr.rel (0) target = $region29
    $region28: #{tpu_custom_call.1} parent=1 // pred_region
      %60 = dma.done [#allocation6], 128
    $region29: #{tpu_custom_call.1} parent=1 // pred_fallthru
      _
    // Predicated region
    $region30: #{tpu_custom_call.1} parent=1 // pred_check
      _
    $region31: #{tpu_custom_call.1} parent=1 // pred_check_branch
      %62 = sbr.rel (0) target = $region33
    $region32: #{tpu_custom_call.1} parent=1 // pred_region
      %64 = dma.done [#allocation9], 256
    $region33: #{tpu_custom_call.1} parent=1 // pred_fallthru
      _
    // Predicated region
    $region34: #{tpu_custom_call.1} parent=1 // pred_check
      _
    $region35: #{tpu_custom_call.1} parent=1 // pred_check_branch
      %66 = sbr.rel (0) target = $region37
    $region36: #{tpu_custom_call.1} parent=1 // pred_region
      %68 = dma.done [#allocation9], 512
    $region37: #{tpu_custom_call.1} parent=1 // pred_fallthru
      _
    %p69 = scmp.eq.s32.totalorder 0, 0
    // Predicated region
    $region38: #{tpu_custom_call.1} parent=1 // pred_check
      %p70 = pneg %p69
    $region39: #{tpu_custom_call.1} parent=1 // pred_check_branch
      %72 = sbr.rel (%p70) target = $region41
    $region40: #{tpu_custom_call.1} parent=1 // pred_region
      %vm73 = vcmask 253952
      %74 = vst.msk [vmem:[#allocation3] sm:$0x1] %vm73, 0.0
      %75 = vst.msk [vmem:[#allocation4] sm:$0x1] %vm73, 0.0
    $region41: #{tpu_custom_call.1} parent=1 // pred_fallthru
      _
    %v76 = vld [vmem:[#allocation5] sm:$0xff]
    %v77 = vld [vmem:[#allocation8] sm:$0xff]
    %v78 = vld [vmem:[#allocation8 + $0x8] sm:$0xff]
    %vm79 = vcmask 130048
    %v81 = vsel %vm79, %v76, 0
    %83 = vmatpush.msra.mxu0 0.0
    %84 = vmatpush.msra.mxu0 0.0
    %85 = vmatpush.msra.mxu0 0.0
    %86 = vmatpush.msra.mxu0 0.0
    %87 = vmatpush.msra.mxu0 0.0
    %88 = vmatpush.msra.mxu0 0.0
    %89 = vmatpush.msra.mxu0 0.0
    %90 = vmatpush.msra.mxu0 0.0
    %91 = vmatpush.msra.mxu0 0.0
    %92 = vmatpush.msra.mxu0 0.0
    %93 = vmatpush.msra.mxu0 0.0
    %94 = vmatpush.msra.mxu0 0.0
    %95 = vmatpush.msra.mxu0 0.0
    %96 = vmatpush.msra.mxu0 0.0
    %97 = vmatpush.msra.mxu0 %v78
    %98 = vmatpush.msra.mxu0 %v77
    %99 = vmatmul.f32.gmra.mxu0 %v81
    %v100 = vpop.f32.mrf.mxu0
    %v101 = vadd.f32 0.0, %v100
    %102 = vdwg.mxu0
    %vm103 = vcmask 261120
    %104 = vst.msk [vmem:[#allocation2] sm:$0xff] %vm103, %v101
    %v105 = vld [vmem:[%s2] sm:$0xff]
    %v106 = vld [vmem:[%s2 + $0x8] sm:$0xff]
    %v107 = vld [vmem:[%s2 + $0x10] sm:$0xff]
    %v108 = vld [vmem:[%s2 + $0x18] sm:$0xff]
    %v109 = vld [vmem:[#allocation10] sm:$0xff]
    %v110 = vld [vmem:[#allocation10 + $0x8] sm:$0xff]
    %v111 = vld [vmem:[#allocation10 + $0x10] sm:$0xff]
    %v112 = vld [vmem:[#allocation10 + $0x18] sm:$0xff]
    %v113 = vld [vmem:[%s3] sm:$0xff]
    %v114 = vld [vmem:[%s3 + $0x8] sm:$0xff]
    %v115 = vld [vmem:[%s3 + $0x10] sm:$0xff]
    %v116 = vld [vmem:[%s3 + $0x18] sm:$0xff]
    %v117 = vld [vmem:[#allocation3] sm:$0x1]
    %v118 = vld [vmem:[#allocation4] sm:$0x1]
    %v119 = vld [vmem:[#allocation2] sm:$0xff]
    %v121 = vsel %vm103, %v117, 0
    %123 = vmatpush.msra.mxu0 0.0
    %124 = vmatpush.msra.mxu0 0.0
    %125 = vmatpush.msra.mxu0 0.0
    %126 = vmatpush.msra.mxu0 0.0
    %127 = vmatpush.msra.mxu0 0.0
    %128 = vmatpush.msra.mxu0 0.0
    %129 = vmatpush.msra.mxu0 0.0
    %130 = vmatpush.msra.mxu0 0.0
    %131 = vmatpush.msra.mxu0 0.0
    %132 = vmatpush.msra.mxu0 0.0
    %133 = vmatpush.msra.mxu0 0.0
    %134 = vmatpush.msra.mxu0 0.0
    %135 = vmatpush.msra.mxu0 %v108
    %136 = vmatpush.msra.mxu0 %v107
    %137 = vmatpush.msra.mxu0 %v106
    %138 = vmatpush.msra.mxu0 %v105
    %139 = vmatmul.f32.gmra.mxu0 %v121
    %v140 = vpop.f32.mrf.mxu0
    %v141 = vadd.f32 %v119, %v140
    %142 = vdwg.mxu0
    %v143 = vmul.f32 %v117, 0.5
    %v144 = vtanh.pop %v141
    %v145 = vmul.f32 %v144, 0.5
    %v146 = vadd.f32 %v143, %v145
    %v148 = vsel %vm103, %v146, 0
    %150 = vmatpush.msra.mxu0 0.0
    %151 = vmatpush.msra.mxu0 0.0
    %152 = vmatpush.msra.mxu0 0.0
    %153 = vmatpush.msra.mxu0 0.0
    %154 = vmatpush.msra.mxu0 0.0
    %155 = vmatpush.msra.mxu0 0.0
    %156 = vmatpush.msra.mxu0 0.0
    %157 = vmatpush.msra.mxu0 0.0
    %158 = vmatpush.msra.mxu0 0.0
    %159 = vmatpush.msra.mxu0 0.0
    %160 = vmatpush.msra.mxu0 0.0
    %161 = vmatpush.msra.mxu0 0.0
    %162 = vmatpush.msra.mxu0 %v116
    %163 = vmatpush.msra.mxu0 %v115
    %164 = vmatpush.msra.mxu0 %v114
    %165 = vmatpush.msra.mxu0 %v113
    %166 = vmatmul.f32.gmra.mxu0 %v148
    %v167 = vpop.f32.mrf.mxu0
    %v168 = vadd.f32 0.0, %v167
    %169 = vdwg.mxu0
    %v171 = vsel %vm103, %v118, 0
    %173 = vmatpush.msra.mxu0 0.0
    %174 = vmatpush.msra.mxu0 0.0
    %175 = vmatpush.msra.mxu0 0.0
    %176 = vmatpush.msra.mxu0 0.0
    %177 = vmatpush.msra.mxu0 0.0
    %178 = vmatpush.msra.mxu0 0.0
    %179 = vmatpush.msra.mxu0 0.0
    %180 = vmatpush.msra.mxu0 0.0
    %181 = vmatpush.msra.mxu0 0.0
    %182 = vmatpush.msra.mxu0 0.0
    %183 = vmatpush.msra.mxu0 0.0
    %184 = vmatpush.msra.mxu0 0.0
    %185 = vmatpush.msra.mxu0 %v112
    %186 = vmatpush.msra.mxu0 %v111
    %187 = vmatpush.msra.mxu0 %v110
    %188 = vmatpush.msra.mxu0 %v109
    %189 = vmatmul.f32.gmra.mxu0 %v171
    %v190 = vpop.f32.mrf.mxu0
    %v191 = vadd.f32 %v168, %v190
    %192 = vdwg.mxu0
    %v193 = vmul.f32 %v118, 0.5
    %v194 = vtanh.pop %v191
    %v195 = vmul.f32 %v194, 0.5
    %v196 = vadd.f32 %v193, %v195
    %v198 = vperm.slane %v196, 0
    %199 = vrot.lane.b32.xlu0 %v198, 32
    %v200 = vpop.permute.xlu0 %199
    %v202 = vsel %vm103, %v146, %v200
    %v204 = vrot.slane %v119, 1
    %206 = vmatpush.msra.mxu0 0.0
    %207 = vmatpush.msra.mxu0 0.0
    %208 = vmatpush.msra.mxu0 0.0
    %209 = vmatpush.msra.mxu0 0.0
    %210 = vmatpush.msra.mxu0 0.0
    %211 = vmatpush.msra.mxu0 0.0
    %212 = vmatpush.msra.mxu0 0.0
    %213 = vmatpush.msra.mxu0 0.0
    %214 = vmatpush.msra.mxu0 0.0
    %215 = vmatpush.msra.mxu0 0.0
    %216 = vmatpush.msra.mxu0 0.0
    %217 = vmatpush.msra.mxu0 0.0
    %218 = vmatpush.msra.mxu0 %v108
    %219 = vmatpush.msra.mxu0 %v107
    %220 = vmatpush.msra.mxu0 %v106
    %221 = vmatpush.msra.mxu0 %v105
    %222 = vmatmul.f32.gmra.mxu0 %v148
    %v223 = vpop.f32.mrf.mxu0
    %v224 = vadd.f32 %v204, %v223
    %225 = vdwg.mxu0
    %v226 = vmul.f32 %v146, 0.5
    %v227 = vtanh.pop %v224
    %v228 = vmul.f32 %v227, 0.5
    %v229 = vadd.f32 %v226, %v228
    %v231 = vsel %vm103, %v229, 0
    %233 = vmatpush.msra.mxu0 0.0
    %234 = vmatpush.msra.mxu0 0.0
    %235 = vmatpush.msra.mxu0 0.0
    %236 = vmatpush.msra.mxu0 0.0
    %237 = vmatpush.msra.mxu0 0.0
    %238 = vmatpush.msra.mxu0 0.0
    %239 = vmatpush.msra.mxu0 0.0
    %240 = vmatpush.msra.mxu0 0.0
    %241 = vmatpush.msra.mxu0 0.0
    %242 = vmatpush.msra.mxu0 0.0
    %243 = vmatpush.msra.mxu0 0.0
    %244 = vmatpush.msra.mxu0 0.0
    %245 = vmatpush.msra.mxu0 %v116
    %246 = vmatpush.msra.mxu0 %v115
    %247 = vmatpush.msra.mxu0 %v114
    %248 = vmatpush.msra.mxu0 %v113
    %249 = vmatmul.f32.gmra.mxu0 %v231
    %v250 = vpop.f32.mrf.mxu0
    %v251 = vadd.f32 0.0, %v250
    %252 = vdwg.mxu0
    %v253 = vsel %vm103, %v196, 0
    %255 = vmatpush.msra.mxu0 0.0
    %256 = vmatpush.msra.mxu0 0.0
    %257 = vmatpush.msra.mxu0 0.0
    %258 = vmatpush.msra.mxu0 0.0
    %259 = vmatpush.msra.mxu0 0.0
    %260 = vmatpush.msra.mxu0 0.0
    %261 = vmatpush.msra.mxu0 0.0
    %262 = vmatpush.msra.mxu0 0.0
    %263 = vmatpush.msra.mxu0 0.0
    %264 = vmatpush.msra.mxu0 0.0
    %265 = vmatpush.msra.mxu0 0.0
    %266 = vmatpush.msra.mxu0 0.0
    %267 = vmatpush.msra.mxu0 %v112
    %268 = vmatpush.msra.mxu0 %v111
    %269 = vmatpush.msra.mxu0 %v110
    %270 = vmatpush.msra.mxu0 %v109
    %271 = vmatmul.f32.gmra.mxu0 %v253
    %v272 = vpop.f32.mrf.mxu0
    %v273 = vadd.f32 %v251, %v272
    %274 = vdwg.mxu0
    %v275 = vmul.f32 %v196, 0.5
    %v276 = vtanh.pop %v273
    %v277 = vmul.f32 %v276, 0.5
    %v278 = vadd.f32 %v275, %v277
    %v280 = vperm.slane %v278, 0
    %281 = vrot.lane.b32.xlu0 %v280, 32
    %v282 = vpop.permute.xlu0 %281
    %v284 = vsel %vm103, %v229, %v282
    %v285 = vrot.slane %v119, 2
    %287 = vmatpush.msra.mxu0 0.0
    %288 = vmatpush.msra.mxu0 0.0
    %289 = vmatpush.msra.mxu0 0.0
    %290 = vmatpush.msra.mxu0 0.0
    %291 = vmatpush.msra.mxu0 0.0
    %292 = vmatpush.msra.mxu0 0.0
    %293 = vmatpush.msra.mxu0 0.0
    %294 = vmatpush.msra.mxu0 0.0
    %295 = vmatpush.msra.mxu0 0.0
    %296 = vmatpush.msra.mxu0 0.0
    %297 = vmatpush.msra.mxu0 0.0
    %298 = vmatpush.msra.mxu0 0.0
    %299 = vmatpush.msra.mxu0 %v108
    %300 = vmatpush.msra.mxu0 %v107
    %301 = vmatpush.msra.mxu0 %v106
    %302 = vmatpush.msra.mxu0 %v105
    %303 = vmatmul.f32.gmra.mxu0 %v231
    %v304 = vpop.f32.mrf.mxu0
    %v305 = vadd.f32 %v285, %v304
    %306 = vdwg.mxu0
    %v307 = vmul.f32 %v229, 0.5
    %v308 = vtanh.pop %v305
    %v309 = vmul.f32 %v308, 0.5
    %v310 = vadd.f32 %v307, %v309
    %v312 = vsel %vm103, %v310, 0
    %314 = vmatpush.msra.mxu0 0.0
    %315 = vmatpush.msra.mxu0 0.0
    %316 = vmatpush.msra.mxu0 0.0
    %317 = vmatpush.msra.mxu0 0.0
    %318 = vmatpush.msra.mxu0 0.0
    %319 = vmatpush.msra.mxu0 0.0
    %320 = vmatpush.msra.mxu0 0.0
    %321 = vmatpush.msra.mxu0 0.0
    %322 = vmatpush.msra.mxu0 0.0
    %323 = vmatpush.msra.mxu0 0.0
    %324 = vmatpush.msra.mxu0 0.0
    %325 = vmatpush.msra.mxu0 0.0
    %326 = vmatpush.msra.mxu0 %v116
    %327 = vmatpush.msra.mxu0 %v115
    %328 = vmatpush.msra.mxu0 %v114
    %329 = vmatpush.msra.mxu0 %v113
    %330 = vmatmul.f32.gmra.mxu0 %v312
    %v331 = vpop.f32.mrf.mxu0
    %v332 = vadd.f32 0.0, %v331
    %333 = vdwg.mxu0
    %v334 = vsel %vm103, %v278, 0
    %336 = vmatpush.msra.mxu0 0.0
    %337 = vmatpush.msra.mxu0 0.0
    %338 = vmatpush.msra.mxu0 0.0
    %339 = vmatpush.msra.mxu0 0.0
    %340 = vmatpush.msra.mxu0 0.0
    %341 = vmatpush.msra.mxu0 0.0
    %342 = vmatpush.msra.mxu0 0.0
    %343 = vmatpush.msra.mxu0 0.0
    %344 = vmatpush.msra.mxu0 0.0
    %345 = vmatpush.msra.mxu0 0.0
    %346 = vmatpush.msra.mxu0 0.0
    %347 = vmatpush.msra.mxu0 0.0
    %348 = vmatpush.msra.mxu0 %v112
    %349 = vmatpush.msra.mxu0 %v111
    %350 = vmatpush.msra.mxu0 %v110
    %351 = vmatpush.msra.mxu0 %v109
    %352 = vmatmul.f32.gmra.mxu0 %v334
    %v353 = vpop.f32.mrf.mxu0
    %v354 = vadd.f32 %v332, %v353
    %355 = vdwg.mxu0
    %v356 = vmul.f32 %v278, 0.5
    %v357 = vtanh.pop %v354
    %v358 = vmul.f32 %v357, 0.5
    %v359 = vadd.f32 %v356, %v358
    %v361 = vperm.slane %v359, 0
    %362 = vrot.lane.b32.xlu0 %v361, 32
    %v363 = vpop.permute.xlu0 %362
    %v365 = vsel %vm103, %v310, %v363
    %v366 = vrot.slane %v119, 3
    %368 = vmatpush.msra.mxu0 0.0
    %369 = vmatpush.msra.mxu0 0.0
    %370 = vmatpush.msra.mxu0 0.0
    %371 = vmatpush.msra.mxu0 0.0
    %372 = vmatpush.msra.mxu0 0.0
    %373 = vmatpush.msra.mxu0 0.0
    %374 = vmatpush.msra.mxu0 0.0
    %375 = vmatpush.msra.mxu0 0.0
    %376 = vmatpush.msra.mxu0 0.0
    %377 = vmatpush.msra.mxu0 0.0
    %378 = vmatpush.msra.mxu0 0.0
    %379 = vmatpush.msra.mxu0 0.0
    %380 = vmatpush.msra.mxu0 %v108
    %381 = vmatpush.msra.mxu0 %v107
    %382 = vmatpush.msra.mxu0 %v106
    %383 = vmatpush.msra.mxu0 %v105
    %384 = vmatmul.f32.gmra.mxu0 %v312
    %v385 = vpop.f32.mrf.mxu0
    %v386 = vadd.f32 %v366, %v385
    %387 = vdwg.mxu0
    %v388 = vmul.f32 %v310, 0.5
    %v389 = vtanh.pop %v386
    %v390 = vmul.f32 %v389, 0.5
    %v391 = vadd.f32 %v388, %v390
    %v393 = vsel %vm103, %v391, 0
    %395 = vmatpush.msra.mxu0 0.0
    %396 = vmatpush.msra.mxu0 0.0
    %397 = vmatpush.msra.mxu0 0.0
    %398 = vmatpush.msra.mxu0 0.0
    %399 = vmatpush.msra.mxu0 0.0
    %400 = vmatpush.msra.mxu0 0.0
    %401 = vmatpush.msra.mxu0 0.0
    %402 = vmatpush.msra.mxu0 0.0
    %403 = vmatpush.msra.mxu0 0.0
    %404 = vmatpush.msra.mxu0 0.0
    %405 = vmatpush.msra.mxu0 0.0
    %406 = vmatpush.msra.mxu0 0.0
    %407 = vmatpush.msra.mxu0 %v116
    %408 = vmatpush.msra.mxu0 %v115
    %409 = vmatpush.msra.mxu0 %v114
    %410 = vmatpush.msra.mxu0 %v113
    %411 = vmatmul.f32.gmra.mxu0 %v393
    %v412 = vpop.f32.mrf.mxu0
    %v413 = vadd.f32 0.0, %v412
    %414 = vdwg.mxu0
    %v415 = vsel %vm103, %v359, 0
    %417 = vmatpush.msra.mxu0 0.0
    %418 = vmatpush.msra.mxu0 0.0
    %419 = vmatpush.msra.mxu0 0.0
    %420 = vmatpush.msra.mxu0 0.0
    %421 = vmatpush.msra.mxu0 0.0
    %422 = vmatpush.msra.mxu0 0.0
    %423 = vmatpush.msra.mxu0 0.0
    %424 = vmatpush.msra.mxu0 0.0
    %425 = vmatpush.msra.mxu0 0.0
    %426 = vmatpush.msra.mxu0 0.0
    %427 = vmatpush.msra.mxu0 0.0
    %428 = vmatpush.msra.mxu0 0.0
    %429 = vmatpush.msra.mxu0 %v112
    %430 = vmatpush.msra.mxu0 %v111
    %431 = vmatpush.msra.mxu0 %v110
    %432 = vmatpush.msra.mxu0 %v109
    %433 = vmatmul.f32.gmra.mxu0 %v415
    %v434 = vpop.f32.mrf.mxu0
    %v435 = vadd.f32 %v413, %v434
    %436 = vdwg.mxu0
    %v437 = vmul.f32 %v359, 0.5
    %v438 = vtanh.pop %v435
    %v439 = vmul.f32 %v438, 0.5
    %v440 = vadd.f32 %v437, %v439
    %v442 = vperm.slane %v440, 0
    %443 = vrot.lane.b32.xlu0 %v442, 32
    %v444 = vpop.permute.xlu0 %443
    %v446 = vsel %vm103, %v391, %v444
    %v447 = vrot.slane %v119, 4
    %449 = vmatpush.msra.mxu0 0.0
    %450 = vmatpush.msra.mxu0 0.0
    %451 = vmatpush.msra.mxu0 0.0
    %452 = vmatpush.msra.mxu0 0.0
    %453 = vmatpush.msra.mxu0 0.0
    %454 = vmatpush.msra.mxu0 0.0
    %455 = vmatpush.msra.mxu0 0.0
    %456 = vmatpush.msra.mxu0 0.0
    %457 = vmatpush.msra.mxu0 0.0
    %458 = vmatpush.msra.mxu0 0.0
    %459 = vmatpush.msra.mxu0 0.0
    %460 = vmatpush.msra.mxu0 0.0
    %461 = vmatpush.msra.mxu0 %v108
    %462 = vmatpush.msra.mxu0 %v107
    %463 = vmatpush.msra.mxu0 %v106
    %464 = vmatpush.msra.mxu0 %v105
    %465 = vmatmul.f32.gmra.mxu0 %v393
    %v466 = vpop.f32.mrf.mxu0
    %v467 = vadd.f32 %v447, %v466
    %468 = vdwg.mxu0
    %v469 = vmul.f32 %v391, 0.5
    %v470 = vtanh.pop %v467
    %v471 = vmul.f32 %v470, 0.5
    %v472 = vadd.f32 %v469, %v471
    %v474 = vsel %vm103, %v472, 0
    %476 = vmatpush.msra.mxu0 0.0
    %477 = vmatpush.msra.mxu0 0.0
    %478 = vmatpush.msra.mxu0 0.0
    %479 = vmatpush.msra.mxu0 0.0
    %480 = vmatpush.msra.mxu0 0.0
    %481 = vmatpush.msra.mxu0 0.0
    %482 = vmatpush.msra.mxu0 0.0
    %483 = vmatpush.msra.mxu0 0.0
    %484 = vmatpush.msra.mxu0 0.0
    %485 = vmatpush.msra.mxu0 0.0
    %486 = vmatpush.msra.mxu0 0.0
    %487 = vmatpush.msra.mxu0 0.0
    %488 = vmatpush.msra.mxu0 %v116
    %489 = vmatpush.msra.mxu0 %v115
    %490 = vmatpush.msra.mxu0 %v114
    %491 = vmatpush.msra.mxu0 %v113
    %492 = vmatmul.f32.gmra.mxu0 %v474
    %v493 = vpop.f32.mrf.mxu0
    %v494 = vadd.f32 0.0, %v493
    %495 = vdwg.mxu0
    %v496 = vsel %vm103, %v440, 0
    %498 = vmatpush.msra.mxu0 0.0
    %499 = vmatpush.msra.mxu0 0.0
    %500 = vmatpush.msra.mxu0 0.0
    %501 = vmatpush.msra.mxu0 0.0
    %502 = vmatpush.msra.mxu0 0.0
    %503 = vmatpush.msra.mxu0 0.0
    %504 = vmatpush.msra.mxu0 0.0
    %505 = vmatpush.msra.mxu0 0.0
    %506 = vmatpush.msra.mxu0 0.0
    %507 = vmatpush.msra.mxu0 0.0
    %508 = vmatpush.msra.mxu0 0.0
    %509 = vmatpush.msra.mxu0 0.0
    %510 = vmatpush.msra.mxu0 %v112
    %511 = vmatpush.msra.mxu0 %v111
    %512 = vmatpush.msra.mxu0 %v110
    %513 = vmatpush.msra.mxu0 %v109
    %514 = vmatmul.f32.gmra.mxu0 %v496
    %v515 = vpop.f32.mrf.mxu0
    %v516 = vadd.f32 %v494, %v515
    %517 = vdwg.mxu0
    %v518 = vmul.f32 %v440, 0.5
    %v519 = vtanh.pop %v516
    %v520 = vmul.f32 %v519, 0.5
    %v521 = vadd.f32 %v518, %v520
    %v523 = vperm.slane %v521, 0
    %524 = vrot.lane.b32.xlu0 %v523, 32
    %v525 = vpop.permute.xlu0 %524
    %v527 = vsel %vm103, %v472, %v525
    %v528 = vrot.slane %v119, 5
    %530 = vmatpush.msra.mxu0 0.0
    %531 = vmatpush.msra.mxu0 0.0
    %532 = vmatpush.msra.mxu0 0.0
    %533 = vmatpush.msra.mxu0 0.0
    %534 = vmatpush.msra.mxu0 0.0
    %535 = vmatpush.msra.mxu0 0.0
    %536 = vmatpush.msra.mxu0 0.0
    %537 = vmatpush.msra.mxu0 0.0
    %538 = vmatpush.msra.mxu0 0.0
    %539 = vmatpush.msra.mxu0 0.0
    %540 = vmatpush.msra.mxu0 0.0
    %541 = vmatpush.msra.mxu0 0.0
    %542 = vmatpush.msra.mxu0 %v108
    %543 = vmatpush.msra.mxu0 %v107
    %544 = vmatpush.msra.mxu0 %v106
    %545 = vmatpush.msra.mxu0 %v105
    %546 = vmatmul.f32.gmra.mxu0 %v474
    %v547 = vpop.f32.mrf.mxu0
    %v548 = vadd.f32 %v528, %v547
    %549 = vdwg.mxu0
    %v550 = vmul.f32 %v472, 0.5
    %v551 = vtanh.pop %v548
    %v552 = vmul.f32 %v551, 0.5
    %v553 = vadd.f32 %v550, %v552
    %v555 = vsel %vm103, %v553, 0
    %557 = vmatpush.msra.mxu0 0.0
    %558 = vmatpush.msra.mxu0 0.0
    %559 = vmatpush.msra.mxu0 0.0
    %560 = vmatpush.msra.mxu0 0.0
    %561 = vmatpush.msra.mxu0 0.0
    %562 = vmatpush.msra.mxu0 0.0
    %563 = vmatpush.msra.mxu0 0.0
    %564 = vmatpush.msra.mxu0 0.0
    %565 = vmatpush.msra.mxu0 0.0
    %566 = vmatpush.msra.mxu0 0.0
    %567 = vmatpush.msra.mxu0 0.0
    %568 = vmatpush.msra.mxu0 0.0
    %569 = vmatpush.msra.mxu0 %v116
    %570 = vmatpush.msra.mxu0 %v115
    %571 = vmatpush.msra.mxu0 %v114
    %572 = vmatpush.msra.mxu0 %v113
    %573 = vmatmul.f32.gmra.mxu0 %v555
    %v574 = vpop.f32.mrf.mxu0
    %v575 = vadd.f32 0.0, %v574
    %576 = vdwg.mxu0
    %v577 = vsel %vm103, %v521, 0
    %579 = vmatpush.msra.mxu0 0.0
    %580 = vmatpush.msra.mxu0 0.0
    %581 = vmatpush.msra.mxu0 0.0
    %582 = vmatpush.msra.mxu0 0.0
    %583 = vmatpush.msra.mxu0 0.0
    %584 = vmatpush.msra.mxu0 0.0
    %585 = vmatpush.msra.mxu0 0.0
    %586 = vmatpush.msra.mxu0 0.0
    %587 = vmatpush.msra.mxu0 0.0
    %588 = vmatpush.msra.mxu0 0.0
    %589 = vmatpush.msra.mxu0 0.0
    %590 = vmatpush.msra.mxu0 0.0
    %591 = vmatpush.msra.mxu0 %v112
    %592 = vmatpush.msra.mxu0 %v111
    %593 = vmatpush.msra.mxu0 %v110
    %594 = vmatpush.msra.mxu0 %v109
    %595 = vmatmul.f32.gmra.mxu0 %v577
    %v596 = vpop.f32.mrf.mxu0
    %v597 = vadd.f32 %v575, %v596
    %598 = vdwg.mxu0
    %v599 = vmul.f32 %v521, 0.5
    %v600 = vtanh.pop %v597
    %v601 = vmul.f32 %v600, 0.5
    %v602 = vadd.f32 %v599, %v601
    %v604 = vperm.slane %v602, 0
    %605 = vrot.lane.b32.xlu0 %v604, 32
    %v606 = vpop.permute.xlu0 %605
    %v608 = vsel %vm103, %v553, %v606
    %v609 = vrot.slane %v119, 6
    %611 = vmatpush.msra.mxu0 0.0
    %612 = vmatpush.msra.mxu0 0.0
    %613 = vmatpush.msra.mxu0 0.0
    %614 = vmatpush.msra.mxu0 0.0
    %615 = vmatpush.msra.mxu0 0.0
    %616 = vmatpush.msra.mxu0 0.0
    %617 = vmatpush.msra.mxu0 0.0
    %618 = vmatpush.msra.mxu0 0.0
    %619 = vmatpush.msra.mxu0 0.0
    %620 = vmatpush.msra.mxu0 0.0
    %621 = vmatpush.msra.mxu0 0.0
    %622 = vmatpush.msra.mxu0 0.0
    %623 = vmatpush.msra.mxu0 %v108
    %624 = vmatpush.msra.mxu0 %v107
    %625 = vmatpush.msra.mxu0 %v106
    %626 = vmatpush.msra.mxu0 %v105
    %627 = vmatmul.f32.gmra.mxu0 %v555
    %v628 = vpop.f32.mrf.mxu0
    %v629 = vadd.f32 %v609, %v628
    %630 = vdwg.mxu0
    %v631 = vmul.f32 %v553, 0.5
    %v632 = vtanh.pop %v629
    %v633 = vmul.f32 %v632, 0.5
    %v634 = vadd.f32 %v631, %v633
    %v636 = vsel %vm103, %v634, 0
    %638 = vmatpush.msra.mxu0 0.0
    %639 = vmatpush.msra.mxu0 0.0
    %640 = vmatpush.msra.mxu0 0.0
    %641 = vmatpush.msra.mxu0 0.0
    %642 = vmatpush.msra.mxu0 0.0
    %643 = vmatpush.msra.mxu0 0.0
    %644 = vmatpush.msra.mxu0 0.0
    %645 = vmatpush.msra.mxu0 0.0
    %646 = vmatpush.msra.mxu0 0.0
    %647 = vmatpush.msra.mxu0 0.0
    %648 = vmatpush.msra.mxu0 0.0
    %649 = vmatpush.msra.mxu0 0.0
    %650 = vmatpush.msra.mxu0 %v116
    %651 = vmatpush.msra.mxu0 %v115
    %652 = vmatpush.msra.mxu0 %v114
    %653 = vmatpush.msra.mxu0 %v113
    %654 = vmatmul.f32.gmra.mxu0 %v636
    %v655 = vpop.f32.mrf.mxu0
    %v656 = vadd.f32 0.0, %v655
    %657 = vdwg.mxu0
    %v658 = vsel %vm103, %v602, 0
    %660 = vmatpush.msra.mxu0 0.0
    %661 = vmatpush.msra.mxu0 0.0
    %662 = vmatpush.msra.mxu0 0.0
    %663 = vmatpush.msra.mxu0 0.0
    %664 = vmatpush.msra.mxu0 0.0
    %665 = vmatpush.msra.mxu0 0.0
    %666 = vmatpush.msra.mxu0 0.0
    %667 = vmatpush.msra.mxu0 0.0
    %668 = vmatpush.msra.mxu0 0.0
    %669 = vmatpush.msra.mxu0 0.0
    %670 = vmatpush.msra.mxu0 0.0
    %671 = vmatpush.msra.mxu0 0.0
    %672 = vmatpush.msra.mxu0 %v112
    %673 = vmatpush.msra.mxu0 %v111
    %674 = vmatpush.msra.mxu0 %v110
    %675 = vmatpush.msra.mxu0 %v109
    %676 = vmatmul.f32.gmra.mxu0 %v658
    %v677 = vpop.f32.mrf.mxu0
    %v678 = vadd.f32 %v656, %v677
    %679 = vdwg.mxu0
    %v680 = vmul.f32 %v602, 0.5
    %v681 = vtanh.pop %v678
    %v682 = vmul.f32 %v681, 0.5
    %v683 = vadd.f32 %v680, %v682
    %v685 = vperm.slane %v683, 0
    %686 = vrot.lane.b32.xlu0 %v685, 32
    %v687 = vpop.permute.xlu0 %686
    %v689 = vsel %vm103, %v634, %v687
    %v690 = vrot.slane %v119, 7
    %692 = vmatpush.msra.mxu0 0.0
    %693 = vmatpush.msra.mxu0 0.0
    %694 = vmatpush.msra.mxu0 0.0
    %695 = vmatpush.msra.mxu0 0.0
    %696 = vmatpush.msra.mxu0 0.0
    %697 = vmatpush.msra.mxu0 0.0
    %698 = vmatpush.msra.mxu0 0.0
    %699 = vmatpush.msra.mxu0 0.0
    %700 = vmatpush.msra.mxu0 0.0
    %701 = vmatpush.msra.mxu0 0.0
    %702 = vmatpush.msra.mxu0 0.0
    %703 = vmatpush.msra.mxu0 0.0
    %704 = vmatpush.msra.mxu0 %v108
    %705 = vmatpush.msra.mxu0 %v107
    %706 = vmatpush.msra.mxu0 %v106
    %707 = vmatpush.msra.mxu0 %v105
    %708 = vmatmul.f32.gmra.mxu0 %v636
    %v709 = vpop.f32.mrf.mxu0
    %v710 = vadd.f32 %v690, %v709
    %711 = vdwg.mxu0
    %v712 = vmul.f32 %v634, 0.5
    %v713 = vtanh.pop %v710
    %v714 = vmul.f32 %v713, 0.5
    %v715 = vadd.f32 %v712, %v714
    %v717 = vsel %vm103, %v715, 0
    %719 = vmatpush.msra.mxu0 0.0
    %720 = vmatpush.msra.mxu0 0.0
    %721 = vmatpush.msra.mxu0 0.0
    %722 = vmatpush.msra.mxu0 0.0
    %723 = vmatpush.msra.mxu0 0.0
    %724 = vmatpush.msra.mxu0 0.0
    %725 = vmatpush.msra.mxu0 0.0
    %726 = vmatpush.msra.mxu0 0.0
    %727 = vmatpush.msra.mxu0 0.0
    %728 = vmatpush.msra.mxu0 0.0
    %729 = vmatpush.msra.mxu0 0.0
    %730 = vmatpush.msra.mxu0 0.0
    %731 = vmatpush.msra.mxu0 %v116
    %732 = vmatpush.msra.mxu0 %v115
    %733 = vmatpush.msra.mxu0 %v114
    %734 = vmatpush.msra.mxu0 %v113
    %735 = vmatmul.f32.gmra.mxu0 %v717
    %v736 = vpop.f32.mrf.mxu0
    %v737 = vadd.f32 0.0, %v736
    %738 = vdwg.mxu0
    %v739 = vsel %vm103, %v683, 0
    %741 = vmatpush.msra.mxu0 0.0
    %742 = vmatpush.msra.mxu0 0.0
    %743 = vmatpush.msra.mxu0 0.0
    %744 = vmatpush.msra.mxu0 0.0
    %745 = vmatpush.msra.mxu0 0.0
    %746 = vmatpush.msra.mxu0 0.0
    %747 = vmatpush.msra.mxu0 0.0
    %748 = vmatpush.msra.mxu0 0.0
    %749 = vmatpush.msra.mxu0 0.0
    %750 = vmatpush.msra.mxu0 0.0
    %751 = vmatpush.msra.mxu0 0.0
    %752 = vmatpush.msra.mxu0 0.0
    %753 = vmatpush.msra.mxu0 %v112
    %754 = vmatpush.msra.mxu0 %v111
    %755 = vmatpush.msra.mxu0 %v110
    %756 = vmatpush.msra.mxu0 %v109
    %757 = vmatmul.f32.gmra.mxu0 %v739
    %v758 = vpop.f32.mrf.mxu0
    %v759 = vadd.f32 %v737, %v758
    %760 = vdwg.mxu0
    %v761 = vmul.f32 %v683, 0.5
    %v762 = vtanh.pop %v759
    %v763 = vmul.f32 %v762, 0.5
    %v764 = vadd.f32 %v761, %v763
    %v766 = vperm.slane %v764, 0
    %767 = vrot.lane.b32.xlu0 %v766, 32
    %v768 = vpop.permute.xlu0 %767
    %v770 = vsel %vm103, %v715, %v768
    %v772 = vrot.slane %v284, 7
    %v775 = vrot.slane %v365, 6
    %v778 = vrot.slane %v446, 5
    %v781 = vrot.slane %v527, 4
    %v784 = vrot.slane %v608, 3
    %v787 = vrot.slane %v689, 2
    %v790 = vrot.slane %v770, 1
    %vm792 = vcmask 1040384
    %v793 = vsel %vm792, %v202, %v772
    %vm794 = vcmask 1041408
    %v795 = vsel %vm794, %v793, %v775
    %vm796 = vcmask 1042432
    %v797 = vsel %vm796, %v795, %v778
    %vm798 = vcmask 1043456
    %v799 = vsel %vm798, %v797, %v781
    %vm800 = vcmask 1044480
    %v801 = vsel %vm800, %v799, %v784
    %vm802 = vcmask 1045504
    %v803 = vsel %vm802, %v801, %v787
    %vm804 = vcmask 1046528
    %v805 = vsel %vm804, %v803, %v790
    %vm806 = vcmask 523264
    %807 = vst.msk [vmem:[#allocation11] sm:$0xff] %vm806, %v805
    %vm808 = vcmask 253952
    %809 = vst.msk [vmem:[#allocation3] sm:$0x1] %vm808, %v715
    %810 = vst.msk [vmem:[#allocation4] sm:$0x1] %vm808, %v764
    // Predicated region
    $region42: #{tpu_custom_call.1} parent=1 // pred_check
      _
    $region43: #{tpu_custom_call.1} parent=1 // pred_check_branch
      %812 = sbr.rel (0) target = $region45
    $region44: #{tpu_custom_call.1} parent=1 // pred_region
      %814 = vsyncadd [#allocation7], 0
      %s816 = sshll.u32 [#allocation11], 4
      %s817 = int_to_ptr.vmem [resolvable:$true] %s816
      %s818 = sshll.u32 %s6, 4
      %s819 = int_to_ptr.hbm [resolvable:$true] %s818
      %821 = dma.vmem_to_hbm [thread:$0]  %s817, 128, %s819, [#allocation7]
    $region45: #{tpu_custom_call.1} parent=1 // pred_fallthru
      _
    // Predicated region
    $region46: #{tpu_custom_call.1} parent=1 // pred_check
      _
    $region47: #{tpu_custom_call.1} parent=1 // pred_check_branch
      %823 = sbr.rel (0) target = $region49
    $region48: #{tpu_custom_call.1} parent=1 // pred_region
      %825 = dma.done [#allocation7], 128
    $region49: #{tpu_custom_call.1} parent=1 // pred_fallthru
      _
    %826 = vsyncpa [#allocation6], 1
    %827 = vsyncpa [#allocation9], 1
    %828 = vsyncpa [#allocation7], 1

</llo_original>
